<compile_context>
chip_gen: v5e
topology: v5e:2x2
jax: 0.10.0
libtpu: 0.0.40
codegen_flags: <defaults>
</compile_context>

<pallas_src>
import functools

import jax
import jax.numpy as jnp
from jax.experimental import pallas as pl
from jax.experimental.pallas import tpu as pltpu

EPS = 1e-5
LANE = 128
SUBLANE = 8


def _round_up(n, m):
    return (n + m - 1) // m * m


def _make_kernel(n_hidden, width, w_pad, o_pad):
    inv_w = 1.0 / float(width)   # LayerNorm over the TRUE feature count

    def kernel(x_ref, w1_ref, wh_ref, wout_ref, vec_ref, o_ref):
        def hidden_block(h, w_bf16, layer):
            r = 3 * layer
            b = vec_ref[r:r + 1, :w_pad]        # bias  [1, w_pad] f32
            g = vec_ref[r + 1:r + 2, :w_pad]    # gamma
            be = vec_ref[r + 2:r + 3, :w_pad]   # beta
            # First layer: x is already bf16 (cast fused upstream); later
            # layers cast the f32 LN output for the MXU.
            h_mxu = h if h.dtype == jnp.bfloat16 else h.astype(jnp.bfloat16)
            # Linear: bf16 MXU operands, f32 accumulate, f32 bias add.
            z = jnp.dot(h_mxu, w_bf16, preferred_element_type=jnp.float32) + b
            # Activation (ReLU) in f32 on the VPU.
            z = jnp.maximum(z, 0.0)
            # LayerNorm over the true `width` features (padded lanes are 0,
            # so full-lane sums scaled by 1/width give exact statistics).
            mu = jnp.sum(z, axis=-1, keepdims=True) * inv_w
            ms = jnp.sum(z * z, axis=-1, keepdims=True) * inv_w
            var = jnp.maximum(ms - mu * mu, 0.0)
            return (z - mu) * jax.lax.rsqrt(var + EPS) * g + be

        h = hidden_block(x_ref[...], w1_ref[...], 0)
        for l in range(n_hidden - 1):
            h = hidden_block(h, wh_ref[l], l + 1)

        b_out = vec_ref[3 * n_hidden:3 * n_hidden + 1, :o_pad]
        o_ref[...] = (jnp.dot(h.astype(jnp.bfloat16), wout_ref[...],
                              preferred_element_type=jnp.float32)
                      + b_out).astype(o_ref.dtype)

    return kernel


def init_params(key, depth, width, input_size, output_size):
    """Deterministic parameter init (PyTorch-Linear-style uniform bounds)."""
    hidden = []
    dims_in = [input_size] + [width] * (depth - 1)
    for d_in in dims_in:
        key, kw, kb = jax.random.split(key, 3)
        bound = 1.0 / float(d_in) ** 0.5
        w = jax.random.uniform(kw, (d_in, width), jnp.float32, -bound, bound)
        b = jax.random.uniform(kb, (width,), jnp.float32, -bound, bound)
        g = jnp.ones((width,), jnp.float32)     # LayerNorm gamma
        be = jnp.zeros((width,), jnp.float32)   # LayerNorm beta
        hidden.append((w, b, g, be))
    key, kw, kb = jax.random.split(key, 3)
    bound = 1.0 / float(width) ** 0.5
    w_out = jax.random.uniform(kw, (width, output_size), jnp.float32, -bound, bound)
    b_out = jax.random.uniform(kb, (output_size,), jnp.float32, -bound, bound)
    return {"hidden": hidden, "out": (w_out, b_out)}


@functools.partial(jax.jit, static_argnames=("output_size", "block_m"))
def prenorm_mlp_forward(x, params, output_size, *, block_m=512):
    hidden = params["hidden"]
    w_out, b_out = params["out"]
    n_hidden = len(hidden)
    assert n_hidden >= 2, "kernel assumes depth >= 2 (module default is 4)"
    width = hidden[0][0].shape[1]

    B = x.shape[0]
    x_flat = x.reshape(B, -1)                 # ext.View(input_size)
    D = x_flat.shape[1]

    # ---- padded, lane-dense layouts --------------------------------------
    d_pad = _round_up(D, LANE)
    w_pad = _round_up(width, LANE)
    o_pad = _round_up(output_size, LANE)

    # Adaptive row block: >=2 grid steps when the batch allows (so the single
    # parallel axis shards across both v7x TensorCores), more when B exceeds
    # block_m; bm is a multiple of 8 sublanes and ~cdiv(B, n_steps) so pad
    # waste stays minimal.
    max_steps = max(1, pl.cdiv(B, SUBLANE))
    want_steps = max(2, pl.cdiv(B, block_m))
    n_steps = max(1, min(max_steps, want_steps))
    bm = _round_up(pl.cdiv(B, n_steps), SUBLANE)
    m_pad = _round_up(B, bm)

    # bf16 x: the cast is fused with the reshape/pad inside this jitted
    # producer (one HBM pass writing bf16), halving the kernel's x-read bytes.
    x_p = jnp.pad(x_flat.astype(jnp.bfloat16), ((0, m_pad - B), (0, d_pad - D)))

    def pad2(a, r, c):
        return jnp.pad(a, ((0, r - a.shape[0]), (0, c - a.shape[1])))

    # first-layer weight [D, width] -> [d_pad, w_pad], bf16 MXU operand
    w1_p = pad2(hidden[0][0], d_pad, w_pad).astype(jnp.bfloat16)
    # remaining hidden weights stacked into one [n_hidden-1, w_pad, w_pad] slab
    wh_p = jnp.stack([pad2(w, w_pad, w_pad) for (w, _, _, _) in hidden[1:]]
                     ).astype(jnp.bfloat16)
    # output weight [width, output_size] -> [w_pad, o_pad]
    wout_p = pad2(w_out, w_pad, o_pad).astype(jnp.bfloat16)

    # all small vectors packed into one f32 slab:
    #   rows 3l+{0,1,2} = bias/gamma/beta of layer l, row 3*n_hidden = b_out.
    # Padded lanes are zero (keeps padded activation lanes identically zero).
    lane = max(w_pad, o_pad)
    rows = []
    for (_, b, g, be) in hidden:
        rows.append(jnp.pad(b, (0, lane - width)))
        rows.append(jnp.pad(g, (0, lane - width)))
        rows.append(jnp.pad(be, (0, lane - width)))
    rows.append(jnp.pad(b_out, (0, lane - output_size)))
    vec = jnp.stack(rows).astype(jnp.float32)
    vec = jnp.pad(vec, ((0, _round_up(vec.shape[0], SUBLANE) - vec.shape[0]),
                        (0, 0)))

    # ---- explicit VMEM budget (v7x: 64 MiB physical, 32 MiB scoped default)
    weight_bytes = 2 * (d_pad * w_pad + (n_hidden - 1) * w_pad * w_pad
                        + w_pad * o_pad)                 # bf16, single-buffered
    vec_bytes = 4 * vec.shape[0] * lane
    io_bytes = 2 * bm * d_pad * 2 + 2 * bm * o_pad * 4   # double-buffered x/out
    act_bytes = 4 * bm * max(w_pad, o_pad) * 4           # live f32 activations
    vmem_bytes = int(min(max(weight_bytes + vec_bytes + io_bytes + act_bytes
                             + (4 << 20), 32 << 20), 64 << 20))

    resident = dict(pipeline_mode=pl.Buffered(1))   # constant-index weights: 1 buffer

    kernel = _make_kernel(n_hidden, width, w_pad, o_pad)

    out_p = pl.pallas_call(
        kernel,
        out_shape=jax.ShapeDtypeStruct((m_pad, o_pad), jnp.float32),
        grid_spec=pltpu.PrefetchScalarGridSpec(
            num_scalar_prefetch=0,
            grid=(m_pad // bm,),
            in_specs=[
                pl.BlockSpec((bm, d_pad), lambda m: (m, 0)),                # x tile (bf16)
                pl.BlockSpec((d_pad, w_pad), lambda m: (0, 0), **resident), # w1
                pl.BlockSpec(wh_p.shape, lambda m: (0, 0, 0), **resident),  # hidden weights
                pl.BlockSpec((w_pad, o_pad), lambda m: (0, 0), **resident), # w_out
                pl.BlockSpec(vec.shape, lambda m: (0, 0), **resident),      # packed vectors
            ],
            out_specs=pl.BlockSpec((bm, o_pad), lambda m: (m, 0)),          # lane-dense
        ),
        compiler_params=pltpu.CompilerParams(
            dimension_semantics=("parallel",),
            vmem_limit_bytes=vmem_bytes),
    )(x_p, w1_p, wh_p, wout_p, vec)

    return out_p[:B, :output_size]


def prenorm_mlp_reference(x, params):
    """Pure-JAX f32 reference of the module forward."""
    h = x.reshape(x.shape[0], -1).astype(jnp.float32)
    for (w, b, g, be) in params["hidden"]:
        h = h @ w + b
        h = jnp.maximum(h, 0.0)
        mu = jnp.mean(h, axis=-1, keepdims=True)
        var = jnp.mean((h - mu) ** 2, axis=-1, keepdims=True)
        h = (h - mu) * jax.lax.rsqrt(var + EPS) * g + be
    w_out, b_out = params["out"]
    return h @ w_out + b_out


if __name__ == "__main__":
    # Small, module-consistent shapes: batch=2, channels=4, spatial=16x16
    depth = 4
    width = 32
    output_size = 10
    B, C, H, W = 2, 4, 16, 16
    input_size = C * H * W  # 1024

    key = jax.random.PRNGKey(0)
    kx, kp = jax.random.split(key)
    x = jax.random.normal(kx, (B, C, H, W), jnp.float32)
    params = init_params(kp, depth, width, input_size, output_size)

    out = prenorm_mlp_forward(x, params, output_size)
    jax.block_until_ready(out)
    assert out.shape == (B, output_size)

    ref = prenorm_mlp_reference(x, params)
    assert jnp.allclose(out, ref, atol=5e-2, rtol=5e-2), float(
        jnp.max(jnp.abs(out - ref)))
    print("KERNEL_OK")
</pallas_src>

<mosaic_0001>
module attributes {stable_mosaic.version = 11 : i64} {
  func.func @kernel(%arg0: i32, %arg1: memref<8x1024xbf16, #tpu.memory_space<vmem>>, %arg2: memref<1024x128xbf16, #tpu.memory_space<vmem>>, %arg3: memref<3x128x128xbf16, #tpu.memory_space<vmem>>, %arg4: memref<128x128xbf16, #tpu.memory_space<vmem>>, %arg5: memref<16x128xf32, #tpu.memory_space<vmem>>, %arg6: memref<8x128xf32, #tpu.memory_space<vmem>>) attributes {dimension_semantics = [#tpu.dimension_semantics<parallel>], iteration_bounds = array<i64: 1>, scalar_prefetch = 0 : i64, scratch_operands = 0 : i64, tpu.core_type = #tpu.core_type<tc>, window_params = [{transform_indices = @transform_0, window_bounds = array<i64: 8, 1024>}, {pipeline_mode = #tpu.pipeline_mode<synchronous>, transform_indices = @transform_1, window_bounds = array<i64: 1024, 128>}, {pipeline_mode = #tpu.pipeline_mode<synchronous>, transform_indices = @transform_2, window_bounds = array<i64: 3, 128, 128>}, {pipeline_mode = #tpu.pipeline_mode<synchronous>, transform_indices = @transform_3, window_bounds = array<i64: 128, 128>}, {pipeline_mode = #tpu.pipeline_mode<synchronous>, transform_indices = @transform_4, window_bounds = array<i64: 16, 128>}, {transform_indices = @transform_5, window_bounds = array<i64: 8, 128>}]} {
    %c0 = arith.constant 0 : index
    %c0_0 = arith.constant 0 : index
    %0 = vector.load %arg1[%c0, %c0_0] : memref<8x1024xbf16, #tpu.memory_space<vmem>>, vector<8x1024xbf16>
    %c0_1 = arith.constant 0 : index
    %c0_2 = arith.constant 0 : index
    %1 = vector.load %arg2[%c0_1, %c0_2] : memref<1024x128xbf16, #tpu.memory_space<vmem>>, vector<1024x128xbf16>
    %c0_3 = arith.constant 0 : index
    %c0_4 = arith.constant 0 : index
    %2 = vector.load %arg5[%c0_3, %c0_4] : memref<16x128xf32, #tpu.memory_space<vmem>>, vector<1x128xf32>
    %c1 = arith.constant 1 : index
    %c0_5 = arith.constant 0 : index
    %3 = vector.load %arg5[%c1, %c0_5] : memref<16x128xf32, #tpu.memory_space<vmem>>, vector<1x128xf32>
    %c2 = arith.constant 2 : index
    %c0_6 = arith.constant 0 : index
    %4 = vector.load %arg5[%c2, %c0_6] : memref<16x128xf32, #tpu.memory_space<vmem>>, vector<1x128xf32>
    %cst = arith.constant dense<0.000000e+00> : vector<8x128xf32>
    %5 = tpu.matmul %0, %1, %cst {dimension_numbers = #tpu.dot_dimension_numbers<[1], [0], [0], [1], [0, 0, 1, 1], [], []>} : vector<8x1024xbf16>, vector<1024x128xbf16>, vector<8x128xf32> -> vector<8x128xf32>
    %6 = vector.broadcast %2 : vector<1x128xf32> to vector<8x128xf32>
    %7 = arith.addf %5, %6 : vector<8x128xf32>
    %cst_7 = arith.constant 0.000000e+00 : f32
    %8 = vector.broadcast %cst_7 : f32 to vector<8x128xf32>
    %9 = arith.maximumf %7, %8 : vector<8x128xf32>
    %cst_8 = arith.constant dense<0.000000e+00> : vector<8xf32>
    %10 = vector.multi_reduction <add>, %9, %cst_8 [1] : vector<8x128xf32> to vector<8xf32>
    %11 = vector.shape_cast %10 : vector<8xf32> to vector<8x1xf32>
    %cst_9 = arith.constant 3.125000e-02 : f32
    %12 = vector.broadcast %cst_9 : f32 to vector<8x1xf32>
    %13 = arith.mulf %11, %12 : vector<8x1xf32>
    %14 = arith.mulf %9, %9 : vector<8x128xf32>
    %cst_10 = arith.constant dense<0.000000e+00> : vector<8xf32>
    %15 = vector.multi_reduction <add>, %14, %cst_10 [1] : vector<8x128xf32> to vector<8xf32>
    %16 = vector.shape_cast %15 : vector<8xf32> to vector<8x1xf32>
    %cst_11 = arith.constant 3.125000e-02 : f32
    %17 = vector.broadcast %cst_11 : f32 to vector<8x1xf32>
    %18 = arith.mulf %16, %17 : vector<8x1xf32>
    %19 = arith.mulf %13, %13 : vector<8x1xf32>
    %20 = arith.subf %18, %19 : vector<8x1xf32>
    %cst_12 = arith.constant 0.000000e+00 : f32
    %21 = vector.broadcast %cst_12 : f32 to vector<8x1xf32>
    %22 = arith.maximumf %20, %21 : vector<8x1xf32>
    %23 = vector.broadcast %13 : vector<8x1xf32> to vector<8x128xf32>
    %24 = arith.subf %9, %23 : vector<8x128xf32>
    %cst_13 = arith.constant 9.99999974E-6 : f32
    %25 = vector.broadcast %cst_13 : f32 to vector<8x1xf32>
    %26 = arith.addf %22, %25 : vector<8x1xf32>
    %27 = math.rsqrt %26 : vector<8x1xf32>
    %28 = vector.broadcast %27 : vector<8x1xf32> to vector<8x128xf32>
    %29 = arith.mulf %24, %28 : vector<8x128xf32>
    %30 = vector.broadcast %3 : vector<1x128xf32> to vector<8x128xf32>
    %31 = arith.mulf %29, %30 : vector<8x128xf32>
    %32 = vector.broadcast %4 : vector<1x128xf32> to vector<8x128xf32>
    %33 = arith.addf %31, %32 : vector<8x128xf32>
    %c0_14 = arith.constant 0 : index
    %c0_15 = arith.constant 0 : index
    %c0_16 = arith.constant 0 : index
    %34 = vector.load %arg3[%c0_14, %c0_15, %c0_16] : memref<3x128x128xbf16, #tpu.memory_space<vmem>>, vector<1x128x128xbf16>
    %35 = vector.shape_cast %34 : vector<1x128x128xbf16> to vector<128x128xbf16>
    %c3 = arith.constant 3 : index
    %c0_17 = arith.constant 0 : index
    %36 = vector.load %arg5[%c3, %c0_17] : memref<16x128xf32, #tpu.memory_space<vmem>>, vector<1x128xf32>
    %c4 = arith.constant 4 : index
    %c0_18 = arith.constant 0 : index
    %37 = vector.load %arg5[%c4, %c0_18] : memref<16x128xf32, #tpu.memory_space<vmem>>, vector<1x128xf32>
    %c5 = arith.constant 5 : index
    %c0_19 = arith.constant 0 : index
    %38 = vector.load %arg5[%c5, %c0_19] : memref<16x128xf32, #tpu.memory_space<vmem>>, vector<1x128xf32>
    %39 = arith.truncf %33 : vector<8x128xf32> to vector<8x128xbf16>
    %cst_20 = arith.constant dense<0.000000e+00> : vector<8x128xf32>
    %40 = tpu.matmul %39, %35, %cst_20 {dimension_numbers = #tpu.dot_dimension_numbers<[1], [0], [0], [1], [0, 0, 1, 1], [], []>} : vector<8x128xbf16>, vector<128x128xbf16>, vector<8x128xf32> -> vector<8x128xf32>
    %41 = vector.broadcast %36 : vector<1x128xf32> to vector<8x128xf32>
    %42 = arith.addf %40, %41 : vector<8x128xf32>
    %cst_21 = arith.constant 0.000000e+00 : f32
    %43 = vector.broadcast %cst_21 : f32 to vector<8x128xf32>
    %44 = arith.maximumf %42, %43 : vector<8x128xf32>
    %cst_22 = arith.constant dense<0.000000e+00> : vector<8xf32>
    %45 = vector.multi_reduction <add>, %44, %cst_22 [1] : vector<8x128xf32> to vector<8xf32>
    %46 = vector.shape_cast %45 : vector<8xf32> to vector<8x1xf32>
    %cst_23 = arith.constant 3.125000e-02 : f32
    %47 = vector.broadcast %cst_23 : f32 to vector<8x1xf32>
    %48 = arith.mulf %46, %47 : vector<8x1xf32>
    %49 = arith.mulf %44, %44 : vector<8x128xf32>
    %cst_24 = arith.constant dense<0.000000e+00> : vector<8xf32>
    %50 = vector.multi_reduction <add>, %49, %cst_24 [1] : vector<8x128xf32> to vector<8xf32>
    %51 = vector.shape_cast %50 : vector<8xf32> to vector<8x1xf32>
    %cst_25 = arith.constant 3.125000e-02 : f32
    %52 = vector.broadcast %cst_25 : f32 to vector<8x1xf32>
    %53 = arith.mulf %51, %52 : vector<8x1xf32>
    %54 = arith.mulf %48, %48 : vector<8x1xf32>
    %55 = arith.subf %53, %54 : vector<8x1xf32>
    %cst_26 = arith.constant 0.000000e+00 : f32
    %56 = vector.broadcast %cst_26 : f32 to vector<8x1xf32>
    %57 = arith.maximumf %55, %56 : vector<8x1xf32>
    %58 = vector.broadcast %48 : vector<8x1xf32> to vector<8x128xf32>
    %59 = arith.subf %44, %58 : vector<8x128xf32>
    %cst_27 = arith.constant 9.99999974E-6 : f32
    %60 = vector.broadcast %cst_27 : f32 to vector<8x1xf32>
    %61 = arith.addf %57, %60 : vector<8x1xf32>
    %62 = math.rsqrt %61 : vector<8x1xf32>
    %63 = vector.broadcast %62 : vector<8x1xf32> to vector<8x128xf32>
    %64 = arith.mulf %59, %63 : vector<8x128xf32>
    %65 = vector.broadcast %37 : vector<1x128xf32> to vector<8x128xf32>
    %66 = arith.mulf %64, %65 : vector<8x128xf32>
    %67 = vector.broadcast %38 : vector<1x128xf32> to vector<8x128xf32>
    %68 = arith.addf %66, %67 : vector<8x128xf32>
    %c1_28 = arith.constant 1 : index
    %c0_29 = arith.constant 0 : index
    %c0_30 = arith.constant 0 : index
    %69 = vector.load %arg3[%c1_28, %c0_29, %c0_30] : memref<3x128x128xbf16, #tpu.memory_space<vmem>>, vector<1x128x128xbf16>
    %70 = vector.shape_cast %69 : vector<1x128x128xbf16> to vector<128x128xbf16>
    %c6 = arith.constant 6 : index
    %c0_31 = arith.constant 0 : index
    %71 = vector.load %arg5[%c6, %c0_31] : memref<16x128xf32, #tpu.memory_space<vmem>>, vector<1x128xf32>
    %c7 = arith.constant 7 : index
    %c0_32 = arith.constant 0 : index
    %72 = vector.load %arg5[%c7, %c0_32] : memref<16x128xf32, #tpu.memory_space<vmem>>, vector<1x128xf32>
    %c8 = arith.constant 8 : index
    %c0_33 = arith.constant 0 : index
    %73 = vector.load %arg5[%c8, %c0_33] : memref<16x128xf32, #tpu.memory_space<vmem>>, vector<1x128xf32>
    %74 = arith.truncf %68 : vector<8x128xf32> to vector<8x128xbf16>
    %cst_34 = arith.constant dense<0.000000e+00> : vector<8x128xf32>
    %75 = tpu.matmul %74, %70, %cst_34 {dimension_numbers = #tpu.dot_dimension_numbers<[1], [0], [0], [1], [0, 0, 1, 1], [], []>} : vector<8x128xbf16>, vector<128x128xbf16>, vector<8x128xf32> -> vector<8x128xf32>
    %76 = vector.broadcast %71 : vector<1x128xf32> to vector<8x128xf32>
    %77 = arith.addf %75, %76 : vector<8x128xf32>
    %cst_35 = arith.constant 0.000000e+00 : f32
    %78 = vector.broadcast %cst_35 : f32 to vector<8x128xf32>
    %79 = arith.maximumf %77, %78 : vector<8x128xf32>
    %cst_36 = arith.constant dense<0.000000e+00> : vector<8xf32>
    %80 = vector.multi_reduction <add>, %79, %cst_36 [1] : vector<8x128xf32> to vector<8xf32>
    %81 = vector.shape_cast %80 : vector<8xf32> to vector<8x1xf32>
    %cst_37 = arith.constant 3.125000e-02 : f32
    %82 = vector.broadcast %cst_37 : f32 to vector<8x1xf32>
    %83 = arith.mulf %81, %82 : vector<8x1xf32>
    %84 = arith.mulf %79, %79 : vector<8x128xf32>
    %cst_38 = arith.constant dense<0.000000e+00> : vector<8xf32>
    %85 = vector.multi_reduction <add>, %84, %cst_38 [1] : vector<8x128xf32> to vector<8xf32>
    %86 = vector.shape_cast %85 : vector<8xf32> to vector<8x1xf32>
    %cst_39 = arith.constant 3.125000e-02 : f32
    %87 = vector.broadcast %cst_39 : f32 to vector<8x1xf32>
    %88 = arith.mulf %86, %87 : vector<8x1xf32>
    %89 = arith.mulf %83, %83 : vector<8x1xf32>
    %90 = arith.subf %88, %89 : vector<8x1xf32>
    %cst_40 = arith.constant 0.000000e+00 : f32
    %91 = vector.broadcast %cst_40 : f32 to vector<8x1xf32>
    %92 = arith.maximumf %90, %91 : vector<8x1xf32>
    %93 = vector.broadcast %83 : vector<8x1xf32> to vector<8x128xf32>
    %94 = arith.subf %79, %93 : vector<8x128xf32>
    %cst_41 = arith.constant 9.99999974E-6 : f32
    %95 = vector.broadcast %cst_41 : f32 to vector<8x1xf32>
    %96 = arith.addf %92, %95 : vector<8x1xf32>
    %97 = math.rsqrt %96 : vector<8x1xf32>
    %98 = vector.broadcast %97 : vector<8x1xf32> to vector<8x128xf32>
    %99 = arith.mulf %94, %98 : vector<8x128xf32>
    %100 = vector.broadcast %72 : vector<1x128xf32> to vector<8x128xf32>
    %101 = arith.mulf %99, %100 : vector<8x128xf32>
    %102 = vector.broadcast %73 : vector<1x128xf32> to vector<8x128xf32>
    %103 = arith.addf %101, %102 : vector<8x128xf32>
    %c2_42 = arith.constant 2 : index
    %c0_43 = arith.constant 0 : index
    %c0_44 = arith.constant 0 : index
    %104 = vector.load %arg3[%c2_42, %c0_43, %c0_44] : memref<3x128x128xbf16, #tpu.memory_space<vmem>>, vector<1x128x128xbf16>
    %105 = vector.shape_cast %104 : vector<1x128x128xbf16> to vector<128x128xbf16>
    %c9 = arith.constant 9 : index
    %c0_45 = arith.constant 0 : index
    %106 = vector.load %arg5[%c9, %c0_45] : memref<16x128xf32, #tpu.memory_space<vmem>>, vector<1x128xf32>
    %c10 = arith.constant 10 : index
    %c0_46 = arith.constant 0 : index
    %107 = vector.load %arg5[%c10, %c0_46] : memref<16x128xf32, #tpu.memory_space<vmem>>, vector<1x128xf32>
    %c11 = arith.constant 11 : index
    %c0_47 = arith.constant 0 : index
    %108 = vector.load %arg5[%c11, %c0_47] : memref<16x128xf32, #tpu.memory_space<vmem>>, vector<1x128xf32>
    %109 = arith.truncf %103 : vector<8x128xf32> to vector<8x128xbf16>
    %cst_48 = arith.constant dense<0.000000e+00> : vector<8x128xf32>
    %110 = tpu.matmul %109, %105, %cst_48 {dimension_numbers = #tpu.dot_dimension_numbers<[1], [0], [0], [1], [0, 0, 1, 1], [], []>} : vector<8x128xbf16>, vector<128x128xbf16>, vector<8x128xf32> -> vector<8x128xf32>
    %111 = vector.broadcast %106 : vector<1x128xf32> to vector<8x128xf32>
    %112 = arith.addf %110, %111 : vector<8x128xf32>
    %cst_49 = arith.constant 0.000000e+00 : f32
    %113 = vector.broadcast %cst_49 : f32 to vector<8x128xf32>
    %114 = arith.maximumf %112, %113 : vector<8x128xf32>
    %cst_50 = arith.constant dense<0.000000e+00> : vector<8xf32>
    %115 = vector.multi_reduction <add>, %114, %cst_50 [1] : vector<8x128xf32> to vector<8xf32>
    %116 = vector.shape_cast %115 : vector<8xf32> to vector<8x1xf32>
    %cst_51 = arith.constant 3.125000e-02 : f32
    %117 = vector.broadcast %cst_51 : f32 to vector<8x1xf32>
    %118 = arith.mulf %116, %117 : vector<8x1xf32>
    %119 = arith.mulf %114, %114 : vector<8x128xf32>
    %cst_52 = arith.constant dense<0.000000e+00> : vector<8xf32>
    %120 = vector.multi_reduction <add>, %119, %cst_52 [1] : vector<8x128xf32> to vector<8xf32>
    %121 = vector.shape_cast %120 : vector<8xf32> to vector<8x1xf32>
    %cst_53 = arith.constant 3.125000e-02 : f32
    %122 = vector.broadcast %cst_53 : f32 to vector<8x1xf32>
    %123 = arith.mulf %121, %122 : vector<8x1xf32>
    %124 = arith.mulf %118, %118 : vector<8x1xf32>
    %125 = arith.subf %123, %124 : vector<8x1xf32>
    %cst_54 = arith.constant 0.000000e+00 : f32
    %126 = vector.broadcast %cst_54 : f32 to vector<8x1xf32>
    %127 = arith.maximumf %125, %126 : vector<8x1xf32>
    %128 = vector.broadcast %118 : vector<8x1xf32> to vector<8x128xf32>
    %129 = arith.subf %114, %128 : vector<8x128xf32>
    %cst_55 = arith.constant 9.99999974E-6 : f32
    %130 = vector.broadcast %cst_55 : f32 to vector<8x1xf32>
    %131 = arith.addf %127, %130 : vector<8x1xf32>
    %132 = math.rsqrt %131 : vector<8x1xf32>
    %133 = vector.broadcast %132 : vector<8x1xf32> to vector<8x128xf32>
    %134 = arith.mulf %129, %133 : vector<8x128xf32>
    %135 = vector.broadcast %107 : vector<1x128xf32> to vector<8x128xf32>
    %136 = arith.mulf %134, %135 : vector<8x128xf32>
    %137 = vector.broadcast %108 : vector<1x128xf32> to vector<8x128xf32>
    %138 = arith.addf %136, %137 : vector<8x128xf32>
    %c12 = arith.constant 12 : index
    %c0_56 = arith.constant 0 : index
    %139 = vector.load %arg5[%c12, %c0_56] : memref<16x128xf32, #tpu.memory_space<vmem>>, vector<1x128xf32>
    %140 = arith.truncf %138 : vector<8x128xf32> to vector<8x128xbf16>
    %c0_57 = arith.constant 0 : index
    %c0_58 = arith.constant 0 : index
    %141 = vector.load %arg4[%c0_57, %c0_58] : memref<128x128xbf16, #tpu.memory_space<vmem>>, vector<128x128xbf16>
    %cst_59 = arith.constant dense<0.000000e+00> : vector<8x128xf32>
    %142 = tpu.matmul %140, %141, %cst_59 {dimension_numbers = #tpu.dot_dimension_numbers<[1], [0], [0], [1], [0, 0, 1, 1], [], []>} : vector<8x128xbf16>, vector<128x128xbf16>, vector<8x128xf32> -> vector<8x128xf32>
    %143 = vector.broadcast %139 : vector<1x128xf32> to vector<8x128xf32>
    %144 = arith.addf %142, %143 : vector<8x128xf32>
    %c0_60 = arith.constant 0 : index
    %c0_61 = arith.constant 0 : index
    %145 = vector.load %arg6[%c0_60, %c0_61] : memref<8x128xf32, #tpu.memory_space<vmem>>, vector<8x128xf32>
    tpu.vector_store %arg6[%c0_60, %c0_61], %144 {strides = array<i32>} : memref<8x128xf32, #tpu.memory_space<vmem>>, vector<8x128xf32>,
    return
  }
  func.func @transform_0(%arg0: i32) -> (i32, i32) {
    %c0_i32 = arith.constant 0 : i32
    %c0_i32_0 = arith.constant 0 : i32
    return %arg0, %c0_i32 : i32, i32
  }
  func.func @transform_1(%arg0: i32) -> (i32, i32) {
    %c0_i32 = arith.constant 0 : i32
    %c0_i32_0 = arith.constant 0 : i32
    %c0_i32_1 = arith.constant 0 : i32
    return %c0_i32, %c0_i32_0 : i32, i32
  }
  func.func @transform_2(%arg0: i32) -> (i32, i32, i32) {
    %c0_i32 = arith.constant 0 : i32
    %c0_i32_0 = arith.constant 0 : i32
    %c0_i32_1 = arith.constant 0 : i32
    %c0_i32_2 = arith.constant 0 : i32
    return %c0_i32, %c0_i32_0, %c0_i32_1 : i32, i32, i32
  }
  func.func @transform_3(%arg0: i32) -> (i32, i32) {
    %c0_i32 = arith.constant 0 : i32
    %c0_i32_0 = arith.constant 0 : i32
    %c0_i32_1 = arith.constant 0 : i32
    return %c0_i32, %c0_i32_0 : i32, i32
  }
  func.func @transform_4(%arg0: i32) -> (i32, i32) {
    %c0_i32 = arith.constant 0 : i32
    %c0_i32_0 = arith.constant 0 : i32
    %c0_i32_1 = arith.constant 0 : i32
    return %c0_i32, %c0_i32_0 : i32, i32
  }
  func.func @transform_5(%arg0: i32) -> (i32, i32) {
    %c0_i32 = arith.constant 0 : i32
    %c0_i32_0 = arith.constant 0 : i32
    return %arg0, %c0_i32 : i32, i32
  }
}

</mosaic_0001>

<llo_original>
// kernel: prenorm_mlp_forward.1
$region0: #{prenorm_mlp_forward.1}
  #allocation0 [shape = 'u32[]', space=smem, size = 0x4, offset = 0x4, fixed_abs, tag = 'smem constant byte address 0x4 - core index']
  #allocation1 [shape = 'u32[72,128]{1,0:T(1,128)}', space=vmem, size = 0x9000, scoped, tag = 'internal scratch']
  %s0 = inlined_call_operand.vmem [shape: bf16[8,1024], index: 0, kind: input, shape index: {}]
  %s1 = inlined_call_operand.vmem [shape: bf16[1024,128], index: 1, kind: input, shape index: {}]
  %s2 = inlined_call_operand.vmem [shape: bf16[3,128,128], index: 2, kind: input, shape index: {}]
  %s3 = inlined_call_operand.vmem [shape: bf16[128,128], index: 3, kind: input, shape index: {}]
  %s4 = inlined_call_operand.vmem [shape: f32[16,128], index: 4, kind: input, shape index: {}]
  %s5 = inlined_call_operand.vmem [shape: f32[8,128], index: 5, kind: output, shape index: {}]
  %s6 = sld [smem:[#allocation0]]
  $region30: #{prenorm_mlp_forward.1} parent=0
    _
  %s8 = ssub.s32 1, %s6
  %s9 = scalar_select 0, %s8, %s6
  // Predicated region
  $region2: #{prenorm_mlp_forward.1} parent=0 // pred_check
    _
  $region3: #{prenorm_mlp_forward.1} parent=0 // pred_check_branch
    %11 = sbr.rel (0) target = $region5
  $region4: #{prenorm_mlp_forward.1} parent=0 // pred_region
    _
  $region5: #{prenorm_mlp_forward.1} parent=0 // pred_fallthru
    _
  // Predicated region
  $region6: #{prenorm_mlp_forward.1} parent=0 // pred_check
    _
  $region7: #{prenorm_mlp_forward.1} parent=0 // pred_check_branch
    %13 = sbr.rel (0) target = $region9
  $region8: #{prenorm_mlp_forward.1} parent=0 // pred_region
    _
  $region9: #{prenorm_mlp_forward.1} parent=0 // pred_fallthru
    _
  // Predicated region
  $region10: #{prenorm_mlp_forward.1} parent=0 // pred_check
    _
  $region11: #{prenorm_mlp_forward.1} parent=0 // pred_check_branch
    %15 = sbr.rel (0) target = $region13
  $region12: #{prenorm_mlp_forward.1} parent=0 // pred_region
    _
  $region13: #{prenorm_mlp_forward.1} parent=0 // pred_fallthru
    _
  // Predicated region
  $region14: #{prenorm_mlp_forward.1} parent=0 // pred_check
    _
  $region15: #{prenorm_mlp_forward.1} parent=0 // pred_check_branch
    %17 = sbr.rel (0) target = $region17
  $region16: #{prenorm_mlp_forward.1} parent=0 // pred_region
    _
  $region17: #{prenorm_mlp_forward.1} parent=0 // pred_fallthru
    _
  // Predicated region
  $region18: #{prenorm_mlp_forward.1} parent=0 // pred_check
    _
  $region19: #{prenorm_mlp_forward.1} parent=0 // pred_check_branch
    %19 = sbr.rel (0) target = $region21
  $region20: #{prenorm_mlp_forward.1} parent=0 // pred_region
    _
  $region21: #{prenorm_mlp_forward.1} parent=0 // pred_fallthru
    _
  %v20 = vld [vmem:[%s0] sm:$0xff]
  %v21 = vld [vmem:[%s0 + $0x8] sm:$0xff]
  %v22 = vld [vmem:[%s0 + $0x10] sm:$0xff]
  %v23 = vld [vmem:[%s0 + $0x18] sm:$0xff]
  %v24 = vld [vmem:[%s1] sm:$0xf]
  %v25 = vld [vmem:[%s1 + $0x4] sm:$0xf]
  %v26 = vld [vmem:[%s1 + $0x8] sm:$0xf]
  %v27 = vld [vmem:[%s1 + $0xc] sm:$0xf]
  %v28 = vld [vmem:[%s1 + $0x10] sm:$0xf]
  %v29 = vld [vmem:[%s1 + $0x14] sm:$0xf]
  %v30 = vld [vmem:[%s1 + $0x18] sm:$0xf]
  %v31 = vld [vmem:[%s1 + $0x1c] sm:$0xf]
  %v32 = vld [vmem:[%s1 + $0x20] sm:$0xf]
  %v33 = vld [vmem:[%s1 + $0x24] sm:$0xf]
  %v34 = vld [vmem:[%s1 + $0x28] sm:$0xf]
  %v35 = vld [vmem:[%s1 + $0x2c] sm:$0xf]
  %v36 = vld [vmem:[%s1 + $0x30] sm:$0xf]
  %v37 = vld [vmem:[%s1 + $0x34] sm:$0xf]
  %v38 = vld [vmem:[%s1 + $0x38] sm:$0xf]
  %v39 = vld [vmem:[%s1 + $0x3c] sm:$0xf]
  %v40 = vld [vmem:[%s1 + $0x40] sm:$0xf]
  %v41 = vld [vmem:[%s1 + $0x44] sm:$0xf]
  %v42 = vld [vmem:[%s1 + $0x48] sm:$0xf]
  %v43 = vld [vmem:[%s1 + $0x4c] sm:$0xf]
  %v44 = vld [vmem:[%s1 + $0x50] sm:$0xf]
  %v45 = vld [vmem:[%s1 + $0x54] sm:$0xf]
  %v46 = vld [vmem:[%s1 + $0x58] sm:$0xf]
  %v47 = vld [vmem:[%s1 + $0x5c] sm:$0xf]
  %v48 = vld [vmem:[%s1 + $0x60] sm:$0xf]
  %v49 = vld [vmem:[%s1 + $0x64] sm:$0xf]
  %v50 = vld [vmem:[%s1 + $0x68] sm:$0xf]
  %v51 = vld [vmem:[%s1 + $0x6c] sm:$0xf]
  %v52 = vld [vmem:[%s1 + $0x70] sm:$0xf]
  %v53 = vld [vmem:[%s1 + $0x74] sm:$0xf]
  %v54 = vld [vmem:[%s1 + $0x78] sm:$0xf]
  %v55 = vld [vmem:[%s1 + $0x7c] sm:$0xf]
  %v56 = vld [vmem:[%s1 + $0x80] sm:$0xf]
  %v57 = vld [vmem:[%s1 + $0x84] sm:$0xf]
  %v58 = vld [vmem:[%s1 + $0x88] sm:$0xf]
  %v59 = vld [vmem:[%s1 + $0x8c] sm:$0xf]
  %v60 = vld [vmem:[%s1 + $0x90] sm:$0xf]
  %v61 = vld [vmem:[%s1 + $0x94] sm:$0xf]
  %v62 = vld [vmem:[%s1 + $0x98] sm:$0xf]
  %v63 = vld [vmem:[%s1 + $0x9c] sm:$0xf]
  %v64 = vld [vmem:[%s1 + $0xa0] sm:$0xf]
  %v65 = vld [vmem:[%s1 + $0xa4] sm:$0xf]
  %v66 = vld [vmem:[%s1 + $0xa8] sm:$0xf]
  %v67 = vld [vmem:[%s1 + $0xac] sm:$0xf]
  %v68 = vld [vmem:[%s1 + $0xb0] sm:$0xf]
  %v69 = vld [vmem:[%s1 + $0xb4] sm:$0xf]
  %v70 = vld [vmem:[%s1 + $0xb8] sm:$0xf]
  %v71 = vld [vmem:[%s1 + $0xbc] sm:$0xf]
  %v72 = vld [vmem:[%s1 + $0xc0] sm:$0xf]
  %v73 = vld [vmem:[%s1 + $0xc4] sm:$0xf]
  %v74 = vld [vmem:[%s1 + $0xc8] sm:$0xf]
  %v75 = vld [vmem:[%s1 + $0xcc] sm:$0xf]
  %v76 = vld [vmem:[%s1 + $0xd0] sm:$0xf]
  %v77 = vld [vmem:[%s1 + $0xd4] sm:$0xf]
  %v78 = vld [vmem:[%s1 + $0xd8] sm:$0xf]
  %v79 = vld [vmem:[%s1 + $0xdc] sm:$0xf]
  %v80 = vld [vmem:[%s1 + $0xe0] sm:$0xf]
  %v81 = vld [vmem:[%s1 + $0xe4] sm:$0xf]
  %v82 = vld [vmem:[%s1 + $0xe8] sm:$0xf]
  %v83 = vld [vmem:[%s1 + $0xec] sm:$0xf]
  %v84 = vld [vmem:[%s1 + $0xf0] sm:$0xf]
  %v85 = vld [vmem:[%s1 + $0xf4] sm:$0xf]
  %v86 = vld [vmem:[%s1 + $0xf8] sm:$0xf]
  %v87 = vld [vmem:[%s1 + $0xfc] sm:$0xf]
  %v88 = vld [vmem:[%s1 + $0x100] sm:$0xf]
  %v89 = vld [vmem:[%s1 + $0x104] sm:$0xf]
  %v90 = vld [vmem:[%s1 + $0x108] sm:$0xf]
  %v91 = vld [vmem:[%s1 + $0x10c] sm:$0xf]
  %v92 = vld [vmem:[%s1 + $0x110] sm:$0xf]
  %v93 = vld [vmem:[%s1 + $0x114] sm:$0xf]
  %v94 = vld [vmem:[%s1 + $0x118] sm:$0xf]
  %v95 = vld [vmem:[%s1 + $0x11c] sm:$0xf]
  %v96 = vld [vmem:[%s1 + $0x120] sm:$0xf]
  %v97 = vld [vmem:[%s1 + $0x124] sm:$0xf]
  %v98 = vld [vmem:[%s1 + $0x128] sm:$0xf]
  %v99 = vld [vmem:[%s1 + $0x12c] sm:$0xf]
  %v100 = vld [vmem:[%s1 + $0x130] sm:$0xf]
  %v101 = vld [vmem:[%s1 + $0x134] sm:$0xf]
  %v102 = vld [vmem:[%s1 + $0x138] sm:$0xf]
  %v103 = vld [vmem:[%s1 + $0x13c] sm:$0xf]
  %v104 = vld [vmem:[%s1 + $0x140] sm:$0xf]
  %v105 = vld [vmem:[%s1 + $0x144] sm:$0xf]
  %v106 = vld [vmem:[%s1 + $0x148] sm:$0xf]
  %v107 = vld [vmem:[%s1 + $0x14c] sm:$0xf]
  %v108 = vld [vmem:[%s1 + $0x150] sm:$0xf]
  %v109 = vld [vmem:[%s1 + $0x154] sm:$0xf]
  %v110 = vld [vmem:[%s1 + $0x158] sm:$0xf]
  %v111 = vld [vmem:[%s1 + $0x15c] sm:$0xf]
  %v112 = vld [vmem:[%s1 + $0x160] sm:$0xf]
  %v113 = vld [vmem:[%s1 + $0x164] sm:$0xf]
  %v114 = vld [vmem:[%s1 + $0x168] sm:$0xf]
  %v115 = vld [vmem:[%s1 + $0x16c] sm:$0xf]
  %v116 = vld [vmem:[%s1 + $0x170] sm:$0xf]
  %v117 = vld [vmem:[%s1 + $0x174] sm:$0xf]
  %v118 = vld [vmem:[%s1 + $0x178] sm:$0xf]
  %v119 = vld [vmem:[%s1 + $0x17c] sm:$0xf]
  %v120 = vld [vmem:[%s1 + $0x180] sm:$0xf]
  %v121 = vld [vmem:[%s1 + $0x184] sm:$0xf]
  %v122 = vld [vmem:[%s1 + $0x188] sm:$0xf]
  %v123 = vld [vmem:[%s1 + $0x18c] sm:$0xf]
  %v124 = vld [vmem:[%s1 + $0x190] sm:$0xf]
  %v125 = vld [vmem:[%s1 + $0x194] sm:$0xf]
  %v126 = vld [vmem:[%s1 + $0x198] sm:$0xf]
  %v127 = vld [vmem:[%s1 + $0x19c] sm:$0xf]
  %v128 = vld [vmem:[%s1 + $0x1a0] sm:$0xf]
  %v129 = vld [vmem:[%s1 + $0x1a4] sm:$0xf]
  %v130 = vld [vmem:[%s1 + $0x1a8] sm:$0xf]
  %v131 = vld [vmem:[%s1 + $0x1ac] sm:$0xf]
  %v132 = vld [vmem:[%s1 + $0x1b0] sm:$0xf]
  %v133 = vld [vmem:[%s1 + $0x1b4] sm:$0xf]
  %v134 = vld [vmem:[%s1 + $0x1b8] sm:$0xf]
  %v135 = vld [vmem:[%s1 + $0x1bc] sm:$0xf]
  %v136 = vld [vmem:[%s1 + $0x1c0] sm:$0xf]
  %v137 = vld [vmem:[%s1 + $0x1c4] sm:$0xf]
  %v138 = vld [vmem:[%s1 + $0x1c8] sm:$0xf]
  %v139 = vld [vmem:[%s1 + $0x1cc] sm:$0xf]
  %v140 = vld [vmem:[%s1 + $0x1d0] sm:$0xf]
  %v141 = vld [vmem:[%s1 + $0x1d4] sm:$0xf]
  %v142 = vld [vmem:[%s1 + $0x1d8] sm:$0xf]
  %v143 = vld [vmem:[%s1 + $0x1dc] sm:$0xf]
  %v144 = vld [vmem:[%s1 + $0x1e0] sm:$0xf]
  %v145 = vld [vmem:[%s1 + $0x1e4] sm:$0xf]
  %v146 = vld [vmem:[%s1 + $0x1e8] sm:$0xf]
  %v147 = vld [vmem:[%s1 + $0x1ec] sm:$0xf]
  %v148 = vld [vmem:[%s1 + $0x1f0] sm:$0xf]
  %v149 = vld [vmem:[%s1 + $0x1f4] sm:$0xf]
  %v150 = vld [vmem:[%s1 + $0x1f8] sm:$0xf]
  %v151 = vld [vmem:[%s1 + $0x1fc] sm:$0xf]
  %v152 = vld [vmem:[%s4] sm:$0x1]
  %v153 = vld [vmem:[%s4 + $0x1] sm:$0x1]
  %v154 = vld [vmem:[%s4 + $0x2] sm:$0x1]
  %v155 = vperm.slane %v152, 0
  %v160 = vunpack.c.l.b16 %v20
  %v161 = vunpack.c.h.b16 %v20
  %v162 = vunpack.c.l.b16 %v21
  %v163 = vunpack.c.h.b16 %v21
  %v164 = vunpack.c.l.b16 %v22
  %v165 = vunpack.c.h.b16 %v22
  %v166 = vunpack.c.l.b16 %v23
  %v167 = vunpack.c.h.b16 %v23
  %v168 = vpack.c.b16 %v160, %v160
  %v169 = vpack.c.b16 %v161, %v161
  %v170 = vpack.c.b16 %v162, %v162
  %v171 = vpack.c.b16 %v163, %v163
  %v172 = vpack.c.b16 %v164, %v164
  %v173 = vpack.c.b16 %v165, %v165
  %v174 = vpack.c.b16 %v166, %v166
  %v175 = vpack.c.b16 %v167, %v167
  %v312 = vunpack.c.l.b16 %v24
  %v313 = vunpack.c.l.b16 %v25
  %v314 = vunpack.c.l.b16 %v26
  %v315 = vunpack.c.l.b16 %v27
  %v316 = vunpack.c.l.b16 %v28
  %v317 = vunpack.c.l.b16 %v29
  %v318 = vunpack.c.l.b16 %v30
  %v319 = vunpack.c.l.b16 %v31
  %v320 = vunpack.c.l.b16 %v32
  %v321 = vunpack.c.l.b16 %v33
  %v322 = vunpack.c.l.b16 %v34
  %v323 = vunpack.c.l.b16 %v35
  %v324 = vunpack.c.l.b16 %v36
  %v325 = vunpack.c.l.b16 %v37
  %v326 = vunpack.c.l.b16 %v38
  %v327 = vunpack.c.l.b16 %v39
  %v328 = vunpack.c.l.b16 %v40
  %v329 = vunpack.c.l.b16 %v41
  %v330 = vunpack.c.l.b16 %v42
  %v331 = vunpack.c.l.b16 %v43
  %v332 = vunpack.c.l.b16 %v44
  %v333 = vunpack.c.l.b16 %v45
  %v334 = vunpack.c.l.b16 %v46
  %v335 = vunpack.c.l.b16 %v47
  %v336 = vunpack.c.l.b16 %v48
  %v337 = vunpack.c.l.b16 %v49
  %v338 = vunpack.c.l.b16 %v50
  %v339 = vunpack.c.l.b16 %v51
  %v340 = vunpack.c.l.b16 %v52
  %v341 = vunpack.c.l.b16 %v53
  %v342 = vunpack.c.l.b16 %v54
  %v343 = vunpack.c.l.b16 %v55
  %v344 = vunpack.c.l.b16 %v56
  %v345 = vunpack.c.l.b16 %v57
  %v346 = vunpack.c.l.b16 %v58
  %v347 = vunpack.c.l.b16 %v59
  %v348 = vunpack.c.l.b16 %v60
  %v349 = vunpack.c.l.b16 %v61
  %v350 = vunpack.c.l.b16 %v62
  %v351 = vunpack.c.l.b16 %v63
  %v352 = vunpack.c.l.b16 %v64
  %v353 = vunpack.c.l.b16 %v65
  %v354 = vunpack.c.l.b16 %v66
  %v355 = vunpack.c.l.b16 %v67
  %v356 = vunpack.c.l.b16 %v68
  %v357 = vunpack.c.l.b16 %v69
  %v358 = vunpack.c.l.b16 %v70
  %v359 = vunpack.c.l.b16 %v71
  %v360 = vunpack.c.l.b16 %v72
  %v361 = vunpack.c.l.b16 %v73
  %v362 = vunpack.c.l.b16 %v74
  %v363 = vunpack.c.l.b16 %v75
  %v364 = vunpack.c.l.b16 %v76
  %v365 = vunpack.c.l.b16 %v77
  %v366 = vunpack.c.l.b16 %v78
  %v367 = vunpack.c.l.b16 %v79
  %v368 = vunpack.c.l.b16 %v80
  %v369 = vunpack.c.l.b16 %v81
  %v370 = vunpack.c.l.b16 %v82
  %v371 = vunpack.c.l.b16 %v83
  %v372 = vunpack.c.l.b16 %v84
  %v373 = vunpack.c.l.b16 %v85
  %v374 = vunpack.c.l.b16 %v86
  %v375 = vunpack.c.l.b16 %v87
  %v376 = vunpack.c.l.b16 %v88
  %v377 = vunpack.c.l.b16 %v89
  %v378 = vunpack.c.l.b16 %v90
  %v379 = vunpack.c.l.b16 %v91
  %v380 = vunpack.c.l.b16 %v92
  %v381 = vunpack.c.l.b16 %v93
  %v382 = vunpack.c.l.b16 %v94
  %v383 = vunpack.c.l.b16 %v95
  %v384 = vunpack.c.l.b16 %v96
  %v385 = vunpack.c.l.b16 %v97
  %v386 = vunpack.c.l.b16 %v98
  %v387 = vunpack.c.l.b16 %v99
  %v388 = vunpack.c.l.b16 %v100
  %v389 = vunpack.c.l.b16 %v101
  %v390 = vunpack.c.l.b16 %v102
  %v391 = vunpack.c.l.b16 %v103
  %v392 = vunpack.c.l.b16 %v104
  %v393 = vunpack.c.l.b16 %v105
  %v394 = vunpack.c.l.b16 %v106
  %v395 = vunpack.c.l.b16 %v107
  %v396 = vunpack.c.l.b16 %v108
  %v397 = vunpack.c.l.b16 %v109
  %v398 = vunpack.c.l.b16 %v110
  %v399 = vunpack.c.l.b16 %v111
  %v400 = vunpack.c.l.b16 %v112
  %v401 = vunpack.c.l.b16 %v113
  %v402 = vunpack.c.l.b16 %v114
  %v403 = vunpack.c.l.b16 %v115
  %v404 = vunpack.c.l.b16 %v116
  %v405 = vunpack.c.l.b16 %v117
  %v406 = vunpack.c.l.b16 %v118
  %v407 = vunpack.c.l.b16 %v119
  %v408 = vunpack.c.l.b16 %v120
  %v409 = vunpack.c.l.b16 %v121
  %v410 = vunpack.c.l.b16 %v122
  %v411 = vunpack.c.l.b16 %v123
  %v412 = vunpack.c.l.b16 %v124
  %v413 = vunpack.c.l.b16 %v125
  %v414 = vunpack.c.l.b16 %v126
  %v415 = vunpack.c.l.b16 %v127
  %v416 = vunpack.c.l.b16 %v128
  %v417 = vunpack.c.l.b16 %v129
  %v418 = vunpack.c.l.b16 %v130
  %v419 = vunpack.c.l.b16 %v131
  %v420 = vunpack.c.l.b16 %v132
  %v421 = vunpack.c.l.b16 %v133
  %v422 = vunpack.c.l.b16 %v134
  %v423 = vunpack.c.l.b16 %v135
  %v424 = vunpack.c.l.b16 %v136
  %v425 = vunpack.c.l.b16 %v137
  %v426 = vunpack.c.l.b16 %v138
  %v427 = vunpack.c.l.b16 %v139
  %v428 = vunpack.c.l.b16 %v140
  %v429 = vunpack.c.l.b16 %v141
  %v430 = vunpack.c.l.b16 %v142
  %v431 = vunpack.c.l.b16 %v143
  %v432 = vunpack.c.l.b16 %v144
  %v433 = vunpack.c.l.b16 %v145
  %v434 = vunpack.c.l.b16 %v146
  %v435 = vunpack.c.l.b16 %v147
  %v436 = vunpack.c.l.b16 %v148
  %v437 = vunpack.c.l.b16 %v149
  %v438 = vunpack.c.l.b16 %v150
  %v439 = vunpack.c.l.b16 %v151
  %v440 = vpack.c.b16 %v313, %v312
  %v441 = vpack.c.b16 %v315, %v314
  %v442 = vpack.c.b16 %v317, %v316
  %v443 = vpack.c.b16 %v319, %v318
  %v444 = vpack.c.b16 %v321, %v320
  %v445 = vpack.c.b16 %v323, %v322
  %v446 = vpack.c.b16 %v325, %v324
  %v447 = vpack.c.b16 %v327, %v326
  %v448 = vpack.c.b16 %v329, %v328
  %v449 = vpack.c.b16 %v331, %v330
  %v450 = vpack.c.b16 %v333, %v332
  %v451 = vpack.c.b16 %v335, %v334
  %v452 = vpack.c.b16 %v337, %v336
  %v453 = vpack.c.b16 %v339, %v338
  %v454 = vpack.c.b16 %v341, %v340
  %v455 = vpack.c.b16 %v343, %v342
  %v456 = vpack.c.b16 %v345, %v344
  %v457 = vpack.c.b16 %v347, %v346
  %v458 = vpack.c.b16 %v349, %v348
  %v459 = vpack.c.b16 %v351, %v350
  %v460 = vpack.c.b16 %v353, %v352
  %v461 = vpack.c.b16 %v355, %v354
  %v462 = vpack.c.b16 %v357, %v356
  %v463 = vpack.c.b16 %v359, %v358
  %v464 = vpack.c.b16 %v361, %v360
  %v465 = vpack.c.b16 %v363, %v362
  %v466 = vpack.c.b16 %v365, %v364
  %v467 = vpack.c.b16 %v367, %v366
  %v468 = vpack.c.b16 %v369, %v368
  %v469 = vpack.c.b16 %v371, %v370
  %v470 = vpack.c.b16 %v373, %v372
  %v471 = vpack.c.b16 %v375, %v374
  %v472 = vpack.c.b16 %v377, %v376
  %v473 = vpack.c.b16 %v379, %v378
  %v474 = vpack.c.b16 %v381, %v380
  %v475 = vpack.c.b16 %v383, %v382
  %v476 = vpack.c.b16 %v385, %v384
  %v477 = vpack.c.b16 %v387, %v386
  %v478 = vpack.c.b16 %v389, %v388
  %v479 = vpack.c.b16 %v391, %v390
  %v480 = vpack.c.b16 %v393, %v392
  %v481 = vpack.c.b16 %v395, %v394
  %v482 = vpack.c.b16 %v397, %v396
  %v483 = vpack.c.b16 %v399, %v398
  %v484 = vpack.c.b16 %v401, %v400
  %v485 = vpack.c.b16 %v403, %v402
  %v486 = vpack.c.b16 %v405, %v404
  %v487 = vpack.c.b16 %v407, %v406
  %v488 = vpack.c.b16 %v409, %v408
  %v489 = vpack.c.b16 %v411, %v410
  %v490 = vpack.c.b16 %v413, %v412
  %v491 = vpack.c.b16 %v415, %v414
  %v492 = vpack.c.b16 %v417, %v416
  %v493 = vpack.c.b16 %v419, %v418
  %v494 = vpack.c.b16 %v421, %v420
  %v495 = vpack.c.b16 %v423, %v422
  %v496 = vpack.c.b16 %v425, %v424
  %v497 = vpack.c.b16 %v427, %v426
  %v498 = vpack.c.b16 %v429, %v428
  %v499 = vpack.c.b16 %v431, %v430
  %v500 = vpack.c.b16 %v433, %v432
  %v501 = vpack.c.b16 %v435, %v434
  %v502 = vpack.c.b16 %v437, %v436
  %v503 = vpack.c.b16 %v439, %v438
  %568 = vmatpush.bf16.msra.mxu0 %v447
  %569 = vmatpush.bf16.msra.mxu0 %v446
  %570 = vmatpush.bf16.msra.mxu0 %v445
  %571 = vmatpush.bf16.msra.mxu0 %v444
  %572 = vmatpush.bf16.msra.mxu0 %v443
  %573 = vmatpush.bf16.msra.mxu0 %v442
  %574 = vmatpush.bf16.msra.mxu0 %v441
  %575 = vmatpush.bf16.msra.mxu0 %v440
  %576 = vmatmul.bf16.gmra.mxu0 %v168
  %v577 = vpop.f32.mrf.mxu0
  %v578 = vadd.f32 %v155, %v577
  %v579 = vpop.f32.mrf.mxu0
  %580 = vdwg.mxu0
  %581 = vmatpush.bf16.msra.mxu0 %v455
  %582 = vmatpush.bf16.msra.mxu0 %v454
  %583 = vmatpush.bf16.msra.mxu0 %v453
  %584 = vmatpush.bf16.msra.mxu0 %v452
  %585 = vmatpush.bf16.msra.mxu0 %v451
  %586 = vmatpush.bf16.msra.mxu0 %v450
  %587 = vmatpush.bf16.msra.mxu0 %v449
  %588 = vmatpush.bf16.msra.mxu0 %v448
  %589 = vmatmul.bf16.gmra.mxu0 %v169
  %v590 = vpop.f32.mrf.mxu0
  %v591 = vadd.f32 %v578, %v590
  %v592 = vpop.f32.mrf.mxu0
  %593 = vdwg.mxu0
  %594 = vmatpush.bf16.msra.mxu0 %v463
  %595 = vmatpush.bf16.msra.mxu0 %v462
  %596 = vmatpush.bf16.msra.mxu0 %v461
  %597 = vmatpush.bf16.msra.mxu0 %v460
  %598 = vmatpush.bf16.msra.mxu0 %v459
  %599 = vmatpush.bf16.msra.mxu0 %v458
  %600 = vmatpush.bf16.msra.mxu0 %v457
  %601 = vmatpush.bf16.msra.mxu0 %v456
  %602 = vmatmul.bf16.gmra.mxu0 %v170
  %v603 = vpop.f32.mrf.mxu0
  %v604 = vadd.f32 %v591, %v603
  %v605 = vpop.f32.mrf.mxu0
  %606 = vdwg.mxu0
  %607 = vmatpush.bf16.msra.mxu0 %v471
  %608 = vmatpush.bf16.msra.mxu0 %v470
  %609 = vmatpush.bf16.msra.mxu0 %v469
  %610 = vmatpush.bf16.msra.mxu0 %v468
  %611 = vmatpush.bf16.msra.mxu0 %v467
  %612 = vmatpush.bf16.msra.mxu0 %v466
  %613 = vmatpush.bf16.msra.mxu0 %v465
  %614 = vmatpush.bf16.msra.mxu0 %v464
  %615 = vmatmul.bf16.gmra.mxu0 %v171
  %v616 = vpop.f32.mrf.mxu0
  %v617 = vadd.f32 %v604, %v616
  %v618 = vpop.f32.mrf.mxu0
  %619 = vdwg.mxu0
  %620 = vmatpush.bf16.msra.mxu0 %v479
  %621 = vmatpush.bf16.msra.mxu0 %v478
  %622 = vmatpush.bf16.msra.mxu0 %v477
  %623 = vmatpush.bf16.msra.mxu0 %v476
  %624 = vmatpush.bf16.msra.mxu0 %v475
  %625 = vmatpush.bf16.msra.mxu0 %v474
  %626 = vmatpush.bf16.msra.mxu0 %v473
  %627 = vmatpush.bf16.msra.mxu0 %v472
  %628 = vmatmul.bf16.gmra.mxu0 %v172
  %v629 = vpop.f32.mrf.mxu0
  %v630 = vadd.f32 %v617, %v629
  %v631 = vpop.f32.mrf.mxu0
  %632 = vdwg.mxu0
  %633 = vmatpush.bf16.msra.mxu0 %v487
  %634 = vmatpush.bf16.msra.mxu0 %v486
  %635 = vmatpush.bf16.msra.mxu0 %v485
  %636 = vmatpush.bf16.msra.mxu0 %v484
  %637 = vmatpush.bf16.msra.mxu0 %v483
  %638 = vmatpush.bf16.msra.mxu0 %v482
  %639 = vmatpush.bf16.msra.mxu0 %v481
  %640 = vmatpush.bf16.msra.mxu0 %v480
  %641 = vmatmul.bf16.gmra.mxu0 %v173
  %v642 = vpop.f32.mrf.mxu0
  %v643 = vadd.f32 %v630, %v642
  %v644 = vpop.f32.mrf.mxu0
  %645 = vdwg.mxu0
  %646 = vmatpush.bf16.msra.mxu0 %v495
  %647 = vmatpush.bf16.msra.mxu0 %v494
  %648 = vmatpush.bf16.msra.mxu0 %v493
  %649 = vmatpush.bf16.msra.mxu0 %v492
  %650 = vmatpush.bf16.msra.mxu0 %v491
  %651 = vmatpush.bf16.msra.mxu0 %v490
  %652 = vmatpush.bf16.msra.mxu0 %v489
  %653 = vmatpush.bf16.msra.mxu0 %v488
  %654 = vmatmul.bf16.gmra.mxu0 %v174
  %v655 = vpop.f32.mrf.mxu0
  %v656 = vadd.f32 %v643, %v655
  %v657 = vpop.f32.mrf.mxu0
  %658 = vdwg.mxu0
  %659 = vmatpush.bf16.msra.mxu0 %v503
  %660 = vmatpush.bf16.msra.mxu0 %v502
  %661 = vmatpush.bf16.msra.mxu0 %v501
  %662 = vmatpush.bf16.msra.mxu0 %v500
  %663 = vmatpush.bf16.msra.mxu0 %v499
  %664 = vmatpush.bf16.msra.mxu0 %v498
  %665 = vmatpush.bf16.msra.mxu0 %v497
  %666 = vmatpush.bf16.msra.mxu0 %v496
  %667 = vmatmul.bf16.gmra.mxu0 %v175
  %v668 = vpop.f32.mrf.mxu0
  %v669 = vadd.f32 %v656, %v668
  %v670 = vpop.f32.mrf.mxu0
  %671 = vdwg.mxu0
  %v672 = vmax.f32 %v669, 0.0
  %673 = vadd.xlane.f32.xlu0 %v672
  %v674 = vpop.xlane.xlu0 %673
  %v675 = vmul.f32 %v674, 0.03125
  %v676 = vmul.f32 %v672, %v672
  %677 = vadd.xlane.f32.xlu0 %v676
  %v678 = vpop.xlane.xlu0 %677
  %v679 = vmul.f32 %v678, 0.03125
  %v680 = vmul.f32 %v675, %v675
  %v681 = vsub.f32 %v679, %v680
  %v682 = vmax.f32 %v681, 0.0
  %v683 = vsub.f32 %v672, %v675
  %v684 = vadd.f32 %v682, 1e-05
  %v685 = vrsqrt.pop %v684
  %v686 = vmul.f32 %v685, %v684
  %v687 = vmul.f32 %v686, %v685
  %v688 = vmul.f32 0.5, %v687
  %v689 = vsub.f32 1.5, %v688
  %v690 = vmul.f32 %v685, %v689
  %vm691 = vweird.f32 %v684
  %vm692 = vweird.f32 %v685
  %vm693 = vmor %vm691, %vm692
  %v694 = vsel %vm693, %v685, %v690
  %v695 = vmul.f32 %v683, %v694
  %v696 = vperm.slane %v153, 0
  %v697 = vmul.f32 %v695, %v696
  %v698 = vperm.slane %v154, 0
  %v699 = vadd.f32 %v697, %v698
  %v700 = vld [vmem:[%s2] sm:$0xf]
  %v701 = vld [vmem:[%s2 + $0x4] sm:$0xf]
  %v702 = vld [vmem:[%s2 + $0x8] sm:$0xf]
  %v703 = vld [vmem:[%s2 + $0xc] sm:$0xf]
  %v704 = vld [vmem:[%s2 + $0x10] sm:$0xf]
  %v705 = vld [vmem:[%s2 + $0x14] sm:$0xf]
  %v706 = vld [vmem:[%s2 + $0x18] sm:$0xf]
  %v707 = vld [vmem:[%s2 + $0x1c] sm:$0xf]
  %v708 = vld [vmem:[%s2 + $0x20] sm:$0xf]
  %v709 = vld [vmem:[%s2 + $0x24] sm:$0xf]
  %v710 = vld [vmem:[%s2 + $0x28] sm:$0xf]
  %v711 = vld [vmem:[%s2 + $0x2c] sm:$0xf]
  %v712 = vld [vmem:[%s2 + $0x30] sm:$0xf]
  %v713 = vld [vmem:[%s2 + $0x34] sm:$0xf]
  %v714 = vld [vmem:[%s2 + $0x38] sm:$0xf]
  %v715 = vld [vmem:[%s2 + $0x3c] sm:$0xf]
  %v716 = vld [vmem:[%s4 + $0x3] sm:$0x1]
  %v717 = vld [vmem:[%s4 + $0x4] sm:$0x1]
  %v718 = vld [vmem:[%s4 + $0x5] sm:$0x1]
  %v719 = vpack.c.bf16 %v699, %v699
  %v720 = vperm.slane %v716, 0
  %v737 = vunpack.c.l.b16 %v700
  %v738 = vunpack.c.l.b16 %v701
  %v739 = vunpack.c.l.b16 %v702
  %v740 = vunpack.c.l.b16 %v703
  %v741 = vunpack.c.l.b16 %v704
  %v742 = vunpack.c.l.b16 %v705
  %v743 = vunpack.c.l.b16 %v706
  %v744 = vunpack.c.l.b16 %v707
  %v745 = vunpack.c.l.b16 %v708
  %v746 = vunpack.c.l.b16 %v709
  %v747 = vunpack.c.l.b16 %v710
  %v748 = vunpack.c.l.b16 %v711
  %v749 = vunpack.c.l.b16 %v712
  %v750 = vunpack.c.l.b16 %v713
  %v751 = vunpack.c.l.b16 %v714
  %v752 = vunpack.c.l.b16 %v715
  %v753 = vpack.c.b16 %v738, %v737
  %v754 = vpack.c.b16 %v740, %v739
  %v755 = vpack.c.b16 %v742, %v741
  %v756 = vpack.c.b16 %v744, %v743
  %v757 = vpack.c.b16 %v746, %v745
  %v758 = vpack.c.b16 %v748, %v747
  %v759 = vpack.c.b16 %v750, %v749
  %v760 = vpack.c.b16 %v752, %v751
  %769 = vmatpush.bf16.msra.mxu0 %v760
  %770 = vmatpush.bf16.msra.mxu0 %v759
  %771 = vmatpush.bf16.msra.mxu0 %v758
  %772 = vmatpush.bf16.msra.mxu0 %v757
  %773 = vmatpush.bf16.msra.mxu0 %v756
  %774 = vmatpush.bf16.msra.mxu0 %v755
  %775 = vmatpush.bf16.msra.mxu0 %v754
  %776 = vmatpush.bf16.msra.mxu0 %v753
  %777 = vmatmul.bf16.gmra.mxu0 %v719
  %v778 = vpop.f32.mrf.mxu0
  %v779 = vadd.f32 %v720, %v778
  %v780 = vpop.f32.mrf.mxu0
  %781 = vdwg.mxu0
  %v782 = vmax.f32 %v779, 0.0
  %783 = vadd.xlane.f32.xlu0 %v782
  %v784 = vpop.xlane.xlu0 %783
  %v785 = vmul.f32 %v784, 0.03125
  %v786 = vmul.f32 %v782, %v782
  %787 = vadd.xlane.f32.xlu0 %v786
  %v788 = vpop.xlane.xlu0 %787
  %v789 = vmul.f32 %v788, 0.03125
  %v790 = vmul.f32 %v785, %v785
  %v791 = vsub.f32 %v789, %v790
  %v792 = vmax.f32 %v791, 0.0
  %v793 = vsub.f32 %v782, %v785
  %v794 = vadd.f32 %v792, 1e-05
  %v795 = vrsqrt.pop %v794
  %v796 = vmul.f32 %v795, %v794
  %v797 = vmul.f32 %v796, %v795
  %v798 = vmul.f32 0.5, %v797
  %v799 = vsub.f32 1.5, %v798
  %v800 = vmul.f32 %v795, %v799
  %vm801 = vweird.f32 %v794
  %vm802 = vweird.f32 %v795
  %vm803 = vmor %vm801, %vm802
  %v804 = vsel %vm803, %v795, %v800
  %v805 = vmul.f32 %v793, %v804
  %v806 = vperm.slane %v717, 0
  %v807 = vmul.f32 %v805, %v806
  %v808 = vperm.slane %v718, 0
  %v809 = vadd.f32 %v807, %v808
  %s810 = scalar_lea.vmem %s2, 64
  %v811 = vld [vmem:[%s810] sm:$0xf]
  %v812 = vld [vmem:[%s810 + $0x4] sm:$0xf]
  %v813 = vld [vmem:[%s810 + $0x8] sm:$0xf]
  %v814 = vld [vmem:[%s810 + $0xc] sm:$0xf]
  %v815 = vld [vmem:[%s810 + $0x10] sm:$0xf]
  %v816 = vld [vmem:[%s810 + $0x14] sm:$0xf]
  %v817 = vld [vmem:[%s810 + $0x18] sm:$0xf]
  %v818 = vld [vmem:[%s810 + $0x1c] sm:$0xf]
  %v819 = vld [vmem:[%s810 + $0x20] sm:$0xf]
  %v820 = vld [vmem:[%s810 + $0x24] sm:$0xf]
  %v821 = vld [vmem:[%s810 + $0x28] sm:$0xf]
  %v822 = vld [vmem:[%s810 + $0x2c] sm:$0xf]
  %v823 = vld [vmem:[%s810 + $0x30] sm:$0xf]
  %v824 = vld [vmem:[%s810 + $0x34] sm:$0xf]
  %v825 = vld [vmem:[%s810 + $0x38] sm:$0xf]
  %v826 = vld [vmem:[%s810 + $0x3c] sm:$0xf]
  %v827 = vld [vmem:[%s4 + $0x6] sm:$0x1]
  %v828 = vld [vmem:[%s4 + $0x7] sm:$0x1]
  %v829 = vld [vmem:[%s4 + $0x8] sm:$0x1]
  %v830 = vpack.c.bf16 %v809, %v809
  %v831 = vperm.slane %v827, 0
  %v848 = vunpack.c.l.b16 %v811
  %v849 = vunpack.c.l.b16 %v812
  %v850 = vunpack.c.l.b16 %v813
  %v851 = vunpack.c.l.b16 %v814
  %v852 = vunpack.c.l.b16 %v815
  %v853 = vunpack.c.l.b16 %v816
  %v854 = vunpack.c.l.b16 %v817
  %v855 = vunpack.c.l.b16 %v818
  %v856 = vunpack.c.l.b16 %v819
  %v857 = vunpack.c.l.b16 %v820
  %v858 = vunpack.c.l.b16 %v821
  %v859 = vunpack.c.l.b16 %v822
  %v860 = vunpack.c.l.b16 %v823
  %v861 = vunpack.c.l.b16 %v824
  %v862 = vunpack.c.l.b16 %v825
  %v863 = vunpack.c.l.b16 %v826
  %v864 = vpack.c.b16 %v849, %v848
  %v865 = vpack.c.b16 %v851, %v850
  %v866 = vpack.c.b16 %v853, %v852
  %v867 = vpack.c.b16 %v855, %v854
  %v868 = vpack.c.b16 %v857, %v856
  %v869 = vpack.c.b16 %v859, %v858
  %v870 = vpack.c.b16 %v861, %v860
  %v871 = vpack.c.b16 %v863, %v862
  %880 = vmatpush.bf16.msra.mxu0 %v871
  %881 = vmatpush.bf16.msra.mxu0 %v870
  %882 = vmatpush.bf16.msra.mxu0 %v869
  %883 = vmatpush.bf16.msra.mxu0 %v868
  %884 = vmatpush.bf16.msra.mxu0 %v867
  %885 = vmatpush.bf16.msra.mxu0 %v866
  %886 = vmatpush.bf16.msra.mxu0 %v865
  %887 = vmatpush.bf16.msra.mxu0 %v864
  %888 = vmatmul.bf16.gmra.mxu0 %v830
  %v889 = vpop.f32.mrf.mxu0
  %v890 = vadd.f32 %v831, %v889
  %v891 = vpop.f32.mrf.mxu0
  %892 = vdwg.mxu0
  %v893 = vmax.f32 %v890, 0.0
  %894 = vadd.xlane.f32.xlu0 %v893
  %v895 = vpop.xlane.xlu0 %894
  %v896 = vmul.f32 %v895, 0.03125
  %v897 = vmul.f32 %v893, %v893
  %898 = vadd.xlane.f32.xlu0 %v897
  %v899 = vpop.xlane.xlu0 %898
  %v900 = vmul.f32 %v899, 0.03125
  %v901 = vmul.f32 %v896, %v896
  %v902 = vsub.f32 %v900, %v901
  %v903 = vmax.f32 %v902, 0.0
  %v904 = vsub.f32 %v893, %v896
  %v905 = vadd.f32 %v903, 1e-05
  %v906 = vrsqrt.pop %v905
  %v907 = vmul.f32 %v906, %v905
  %v908 = vmul.f32 %v907, %v906
  %v909 = vmul.f32 0.5, %v908
  %v910 = vsub.f32 1.5, %v909
  %v911 = vmul.f32 %v906, %v910
  %vm912 = vweird.f32 %v905
  %vm913 = vweird.f32 %v906
  %vm914 = vmor %vm912, %vm913
  %v915 = vsel %vm914, %v906, %v911
  %v916 = vmul.f32 %v904, %v915
  %v917 = vperm.slane %v828, 0
  %v918 = vmul.f32 %v916, %v917
  %v919 = vperm.slane %v829, 0
  %v920 = vadd.f32 %v918, %v919
  %s921 = scalar_lea.vmem %s2, 128
  %v922 = vld [vmem:[%s921] sm:$0xf]
  %v923 = vld [vmem:[%s921 + $0x4] sm:$0xf]
  %v924 = vld [vmem:[%s921 + $0x8] sm:$0xf]
  %v925 = vld [vmem:[%s921 + $0xc] sm:$0xf]
  %v926 = vld [vmem:[%s921 + $0x10] sm:$0xf]
  %v927 = vld [vmem:[%s921 + $0x14] sm:$0xf]
  %v928 = vld [vmem:[%s921 + $0x18] sm:$0xf]
  %v929 = vld [vmem:[%s921 + $0x1c] sm:$0xf]
  %v930 = vld [vmem:[%s921 + $0x20] sm:$0xf]
  %v931 = vld [vmem:[%s921 + $0x24] sm:$0xf]
  %v932 = vld [vmem:[%s921 + $0x28] sm:$0xf]
  %v933 = vld [vmem:[%s921 + $0x2c] sm:$0xf]
  %v934 = vld [vmem:[%s921 + $0x30] sm:$0xf]
  %v935 = vld [vmem:[%s921 + $0x34] sm:$0xf]
  %v936 = vld [vmem:[%s921 + $0x38] sm:$0xf]
  %v937 = vld [vmem:[%s921 + $0x3c] sm:$0xf]
  %v938 = vld [vmem:[%s4 + $0x9] sm:$0x1]
  %v939 = vld [vmem:[%s4 + $0xa] sm:$0x1]
  %v940 = vld [vmem:[%s4 + $0xb] sm:$0x1]
  %v941 = vpack.c.bf16 %v920, %v920
  %v942 = vperm.slane %v938, 0
  %v959 = vunpack.c.l.b16 %v922
  %v960 = vunpack.c.l.b16 %v923
  %v961 = vunpack.c.l.b16 %v924
  %v962 = vunpack.c.l.b16 %v925
  %v963 = vunpack.c.l.b16 %v926
  %v964 = vunpack.c.l.b16 %v927
  %v965 = vunpack.c.l.b16 %v928
  %v966 = vunpack.c.l.b16 %v929
  %v967 = vunpack.c.l.b16 %v930
  %v968 = vunpack.c.l.b16 %v931
  %v969 = vunpack.c.l.b16 %v932
  %v970 = vunpack.c.l.b16 %v933
  %v971 = vunpack.c.l.b16 %v934
  %v972 = vunpack.c.l.b16 %v935
  %v973 = vunpack.c.l.b16 %v936
  %v974 = vunpack.c.l.b16 %v937
  %v975 = vpack.c.b16 %v960, %v959
  %v976 = vpack.c.b16 %v962, %v961
  %v977 = vpack.c.b16 %v964, %v963
  %v978 = vpack.c.b16 %v966, %v965
  %v979 = vpack.c.b16 %v968, %v967
  %v980 = vpack.c.b16 %v970, %v969
  %v981 = vpack.c.b16 %v972, %v971
  %v982 = vpack.c.b16 %v974, %v973
  %991 = vmatpush.bf16.msra.mxu0 %v982
  %992 = vmatpush.bf16.msra.mxu0 %v981
  %993 = vmatpush.bf16.msra.mxu0 %v980
  %994 = vmatpush.bf16.msra.mxu0 %v979
  %995 = vmatpush.bf16.msra.mxu0 %v978
  %996 = vmatpush.bf16.msra.mxu0 %v977
  %997 = vmatpush.bf16.msra.mxu0 %v976
  %998 = vmatpush.bf16.msra.mxu0 %v975
  %999 = vmatmul.bf16.gmra.mxu0 %v941
  %v1000 = vpop.f32.mrf.mxu0
  %v1001 = vadd.f32 %v942, %v1000
  %v1002 = vpop.f32.mrf.mxu0
  %1003 = vdwg.mxu0
  %v1004 = vmax.f32 %v1001, 0.0
  %1005 = vadd.xlane.f32.xlu0 %v1004
  %v1006 = vpop.xlane.xlu0 %1005
  %v1007 = vmul.f32 %v1006, 0.03125
  %v1008 = vmul.f32 %v1004, %v1004
  %1009 = vadd.xlane.f32.xlu0 %v1008
  %v1010 = vpop.xlane.xlu0 %1009
  %v1011 = vmul.f32 %v1010, 0.03125
  %v1012 = vmul.f32 %v1007, %v1007
  %v1013 = vsub.f32 %v1011, %v1012
  %v1014 = vmax.f32 %v1013, 0.0
  %v1015 = vsub.f32 %v1004, %v1007
  %v1016 = vadd.f32 %v1014, 1e-05
  %v1017 = vrsqrt.pop %v1016
  %v1018 = vmul.f32 %v1017, %v1016
  %v1019 = vmul.f32 %v1018, %v1017
  %v1020 = vmul.f32 0.5, %v1019
  %v1021 = vsub.f32 1.5, %v1020
  %v1022 = vmul.f32 %v1017, %v1021
  %vm1023 = vweird.f32 %v1016
  %vm1024 = vweird.f32 %v1017
  %vm1025 = vmor %vm1023, %vm1024
  %v1026 = vsel %vm1025, %v1017, %v1022
  %v1027 = vmul.f32 %v1015, %v1026
  %v1028 = vperm.slane %v939, 0
  %v1029 = vmul.f32 %v1027, %v1028
  %v1030 = vperm.slane %v940, 0
  %v1031 = vadd.f32 %v1029, %v1030
  %v1032 = vld [vmem:[%s4 + $0xc] sm:$0x1]
  %v1033 = vpack.c.bf16 %v1031, %v1031
  %v1034 = vld [vmem:[%s3] sm:$0xf]
  %v1035 = vld [vmem:[%s3 + $0x4] sm:$0xf]
  %v1036 = vld [vmem:[%s3 + $0x8] sm:$0xf]
  %v1037 = vld [vmem:[%s3 + $0xc] sm:$0xf]
  %v1038 = vld [vmem:[%s3 + $0x10] sm:$0xf]
  %v1039 = vld [vmem:[%s3 + $0x14] sm:$0xf]
  %v1040 = vld [vmem:[%s3 + $0x18] sm:$0xf]
  %v1041 = vld [vmem:[%s3 + $0x1c] sm:$0xf]
  %v1042 = vld [vmem:[%s3 + $0x20] sm:$0xf]
  %v1043 = vld [vmem:[%s3 + $0x24] sm:$0xf]
  %v1044 = vld [vmem:[%s3 + $0x28] sm:$0xf]
  %v1045 = vld [vmem:[%s3 + $0x2c] sm:$0xf]
  %v1046 = vld [vmem:[%s3 + $0x30] sm:$0xf]
  %v1047 = vld [vmem:[%s3 + $0x34] sm:$0xf]
  %v1048 = vld [vmem:[%s3 + $0x38] sm:$0xf]
  %v1049 = vld [vmem:[%s3 + $0x3c] sm:$0xf]
  %v1050 = vperm.slane %v1032, 0
  %v1067 = vunpack.c.l.b16 %v1034
  %v1068 = vunpack.c.l.b16 %v1035
  %v1069 = vunpack.c.l.b16 %v1036
  %v1070 = vunpack.c.l.b16 %v1037
  %v1071 = vunpack.c.l.b16 %v1038
  %v1072 = vunpack.c.l.b16 %v1039
  %v1073 = vunpack.c.l.b16 %v1040
  %v1074 = vunpack.c.l.b16 %v1041
  %v1075 = vunpack.c.l.b16 %v1042
  %v1076 = vunpack.c.l.b16 %v1043
  %v1077 = vunpack.c.l.b16 %v1044
  %v1078 = vunpack.c.l.b16 %v1045
  %v1079 = vunpack.c.l.b16 %v1046
  %v1080 = vunpack.c.l.b16 %v1047
  %v1081 = vunpack.c.l.b16 %v1048
  %v1082 = vunpack.c.l.b16 %v1049
  %v1083 = vpack.c.b16 %v1068, %v1067
  %v1084 = vpack.c.b16 %v1070, %v1069
  %v1085 = vpack.c.b16 %v1072, %v1071
  %v1086 = vpack.c.b16 %v1074, %v1073
  %v1087 = vpack.c.b16 %v1076, %v1075
  %v1088 = vpack.c.b16 %v1078, %v1077
  %v1089 = vpack.c.b16 %v1080, %v1079
  %v1090 = vpack.c.b16 %v1082, %v1081
  %1099 = vmatpush.bf16.msra.mxu0 %v1090
  %1100 = vmatpush.bf16.msra.mxu0 %v1089
  %1101 = vmatpush.bf16.msra.mxu0 %v1088
  %1102 = vmatpush.bf16.msra.mxu0 %v1087
  %1103 = vmatpush.bf16.msra.mxu0 %v1086
  %1104 = vmatpush.bf16.msra.mxu0 %v1085
  %1105 = vmatpush.bf16.msra.mxu0 %v1084
  %1106 = vmatpush.bf16.msra.mxu0 %v1083
  %1107 = vmatmul.bf16.gmra.mxu0 %v1033
  %v1108 = vpop.f32.mrf.mxu0
  %v1109 = vadd.f32 %v1050, %v1108
  %v1110 = vpop.f32.mrf.mxu0
  %1111 = vdwg.mxu0
  %1112 = vst [vmem:[%s5] sm:$0xff] %v1109
  // Predicated region
  $region22: #{prenorm_mlp_forward.1} parent=0 // pred_check
    _
  $region23: #{prenorm_mlp_forward.1} parent=0 // pred_check_branch
    %1114 = sbr.rel (0) target = $region25
  $region24: #{prenorm_mlp_forward.1} parent=0 // pred_region
    _
  $region25: #{prenorm_mlp_forward.1} parent=0 // pred_fallthru
    _
  // Predicated region
  $region26: #{prenorm_mlp_forward.1} parent=0 // pred_check
    _
  $region27: #{prenorm_mlp_forward.1} parent=0 // pred_check_branch
    %1116 = sbr.rel (0) target = $region29
  $region28: #{prenorm_mlp_forward.1} parent=0 // pred_region
    _
  $region29: #{prenorm_mlp_forward.1} parent=0 // pred_fallthru
    _

</llo_original>
